<compile_context>
chip_gen: v7x
topology: tpu7x:2x2x1
jax: 0.10.0
libtpu: 0.0.40
codegen_flags: <defaults>
</compile_context>

<pallas_src>
import functools

import jax
import jax.numpy as jnp
from jax.experimental import pallas as pl
from jax.experimental.pallas import tpu as pltpu


# ----------------------------------------------------------------------------
# Kernel
# ----------------------------------------------------------------------------
def _attention_kernel(x1_ref, x2_ref, we_ref, be_ref, ww_ref, bw_ref, o_ref,
                      *, matmul_dtype, fuse_k):
    D = ww_ref.shape[1]

    x1m = x1_ref[...].astype(matmul_dtype)
    x2m = x2_ref[...].astype(matmul_dtype)

    # evidence = tanh([x1, x2] @ We + be), f32 accumulation on the MXU.
    if fuse_k:
        # Single K=2D matmul: fills the 256-deep MXU on v6e/v7x.
        cat = jnp.concatenate([x1m, x2m], axis=-1)
        ev = jnp.dot(cat, we_ref[...], preferred_element_type=jnp.float32)
    else:
        # Two accumulating K=D matmuls (128-deep MXU already saturated).
        ev = jnp.dot(x1m, we_ref[:D, :], preferred_element_type=jnp.float32)
        ev = ev + jnp.dot(x2m, we_ref[D:, :], preferred_element_type=jnp.float32)
    ev = jnp.tanh(ev + be_ref[...])                            # f32 (EUP)

    # weight = sigmoid(evidence @ Ww + bw)
    w = jnp.dot(ev.astype(matmul_dtype), ww_ref[...],
                preferred_element_type=jnp.float32)
    w = jax.nn.sigmoid(w + bw_ref[...])                        # f32 (EUP)

    # Gated fusion: x1*w + x2*(1-w) == x2 + w*(x1 - x2).
    # Re-read x1/x2 here (VMEM loads are cheap; keeps f32 live ranges short).
    x1 = x1_ref[...].astype(jnp.float32)
    x2 = x2_ref[...].astype(jnp.float32)
    o_ref[...] = (x2 + w * (x1 - x2)).astype(o_ref.dtype)


# ----------------------------------------------------------------------------
# Generation-aware configuration
# ----------------------------------------------------------------------------
def _device_kind():
    try:
        return jax.devices()[0].device_kind.lower()
    except Exception:
        return ""


def _vmem_budget_and_limit(kind):
    # v5*/v6* have 128 MiB physical VMEM -> be generous; v7x (64 MiB) and
    # unknown chips keep the conservative sizing.
    if ("v5" in kind) or ("v6" in kind):
        return 48 * 1024 * 1024, 64 * 1024 * 1024
    return 24 * 1024 * 1024, 32 * 1024 * 1024


def _default_fuse_k(kind):
    # 256-deep MXU (v6e/v7x): one K=2D matmul fills the array. Older
    # 128-deep MXUs are already saturated at K=D -> two accumulating matmuls.
    return not any(g in kind for g in ("v2", "v3", "v4", "v5"))


def _choose_tile_m(M, D, io_itemsize, mm_itemsize, vmem_budget):
    """Row tile: VMEM-budgeted, sublane/MXU aligned, >= 4 even grid steps."""
    row_align = max(8, 32 // max(io_itemsize, 1))   # 8 (f32), 16 (bf16), 32 (i8)
    if M < row_align:
        return M

    # Double-buffered x1/x2/out row tiles + f32 intermediates (ev, w, temps).
    bytes_per_row = 2 * 3 * D * io_itemsize + 4 * D * 4
    # Grid-invariant weights/biases: fetched once, but two buffers are allocated.
    weight_bytes = 2 * (3 * D * D * mm_itemsize + 2 * D * 4)
    budget = max(vmem_budget - weight_bytes, 1 << 20)
    max_tile = int(min(max(budget // bytes_per_row, row_align), 2048))

    # Target >= 4 grid steps when M permits: hides input DMA behind compute
    # and gives each v7x TensorCore a pipelined share of the grid.
    target_steps = 4 if M >= 512 else 2
    tile = min(max_tile, -(-M // target_steps), M)
    if M >= 128:
        tile = max(128, (tile // 128) * 128)        # full MXU rows, lane-dense
    else:
        tile = max(row_align, (tile // row_align) * row_align)

    # Prefer an even step count so a two-core split has no one-step tail.
    steps = -(-M // tile)
    if steps > 1 and steps % 2 == 1:
        align = 128 if M >= 128 else row_align
        cand = -(-M // (steps + 1))
        cand = -(-cand // align) * align            # round UP to alignment
        if 0 < cand <= tile:
            tile = cand
    return int(tile)


# ----------------------------------------------------------------------------
# Wrapper
# ----------------------------------------------------------------------------
def attention_template(x1, x2, we, be, ww, bw, *, tile_m=None,
                       matmul_dtype=jnp.bfloat16, fuse_evidence_k=None):
    """Gated fusion of two (B, S, D) sequences.

    x1, x2: (B, S, D)  (their dtype is the HBM I/O dtype; pass bf16 for a
                        half-byte-traffic path — the kernel is HBM-bound).
    we: (2D, D) evidence weight stored (in, out); be: (D,)
    ww: (D, D) gate weight stored (in, out);     bw: (D,)
    matmul_dtype: MXU operand dtype (accumulation is always f32).
    """
    B, S, D = x1.shape
    io_dtype = jnp.dtype(x1.dtype)
    matmul_dtype = jnp.dtype(matmul_dtype or io_dtype)

    kind = _device_kind()
    if fuse_evidence_k is None:
        fuse_evidence_k = _default_fuse_k(kind)
    vmem_budget, vmem_limit = _vmem_budget_and_limit(kind)

    M = B * S
    x1f = x1.reshape(M, D)
    x2f = x2.reshape(M, D)

    # Keep the feature dim lane-dense (multiple of 128): zero-pad if needed so
    # the output BlockSpec always uses unmasked vector stores.
    Dp = max(128, -(-D // 128) * 128)
    if Dp != D:
        pad = Dp - D
        x1f = jnp.pad(x1f, ((0, 0), (0, pad)))
        x2f = jnp.pad(x2f, ((0, 0), (0, pad)))
        we_p = jnp.zeros((2 * Dp, Dp), we.dtype)
        we_p = we_p.at[:D, :D].set(we[:D])
        we_p = we_p.at[Dp:Dp + D, :D].set(we[D:])
        ww_p = jnp.zeros((Dp, Dp), ww.dtype).at[:D, :D].set(ww)
        be_p = jnp.zeros((Dp,), jnp.float32).at[:D].set(be.astype(jnp.float32))
        bw_p = jnp.zeros((Dp,), jnp.float32).at[:D].set(bw.astype(jnp.float32))
    else:
        we_p, ww_p, be_p, bw_p = we, ww, be, bw

    # Pre-cast grid-invariant operands ONCE (no per-step casts in the kernel).
    we_c = we_p.astype(matmul_dtype)
    ww_c = ww_p.astype(matmul_dtype)
    be2 = be_p.astype(jnp.float32).reshape(1, Dp)
    bw2 = bw_p.astype(jnp.float32).reshape(1, Dp)

    io_itemsize = io_dtype.itemsize
    mm_itemsize = jnp.dtype(matmul_dtype).itemsize
    if tile_m is None:
        tile_m = _choose_tile_m(M, Dp, io_itemsize, mm_itemsize, vmem_budget)
    grid = (pl.cdiv(M, tile_m),)

    kernel = functools.partial(_attention_kernel,
                               matmul_dtype=matmul_dtype,
                               fuse_k=bool(fuse_evidence_k))

    cost = pl.CostEstimate(
        flops=int(6 * M * Dp * Dp),                    # three MxDxD matmuls
        transcendentals=int(2 * M * Dp),               # tanh + sigmoid
        bytes_accessed=int(3 * M * Dp * io_itemsize
                           + 3 * Dp * Dp * mm_itemsize + 2 * Dp * 4),
    )

    row_spec = pl.BlockSpec((tile_m, Dp), lambda i: (i, 0))

    def const_spec(shape):
        # Grid-invariant operands: constant index_map -> fetched only once.
        return pl.BlockSpec(shape, lambda i: (0, 0))

    out = pl.pallas_call(
        kernel,
        out_shape=jax.ShapeDtypeStruct((M, Dp), io_dtype),
        grid_spec=pltpu.PrefetchScalarGridSpec(
            num_scalar_prefetch=0,
            grid=grid,
            in_specs=[
                row_spec,                    # x1 rows
                row_spec,                    # x2 rows
                const_spec((2 * Dp, Dp)),    # We  (both halves, one DMA stream)
                const_spec((1, Dp)),         # be
                const_spec((Dp, Dp)),        # Ww
                const_spec((1, Dp)),         # bw
            ],
            out_specs=row_spec,
        ),
        compiler_params=pltpu.CompilerParams(
            dimension_semantics=("parallel",),
            vmem_limit_bytes=vmem_limit,
        ),
        cost_estimate=cost,
    )(x1f, x2f, we_c, be2, ww_c, bw2)

    if Dp != D:
        out = out[:, :D]
    return out.reshape(B, S, D)


# ----------------------------------------------------------------------------
# Reference + demo
# ----------------------------------------------------------------------------
def _xavier_uniform(key, fan_in, fan_out, shape):
    # Matches torch.nn.init.xavier_uniform_ (gain=1).
    limit = jnp.sqrt(6.0 / (fan_in + fan_out))
    return jax.random.uniform(key, shape, jnp.float32, -limit, limit)


def _reference(x1, x2, we, be, ww, bw):
    cat = jnp.concatenate([x1, x2], axis=2)
    ev = jnp.tanh(cat @ we + be)
    w = jax.nn.sigmoid(ev @ ww + bw)
    return x1 * w + x2 * (1.0 - w)


if __name__ == "__main__":
    # Small but lane-dense demo: D % 128 == 0 keeps vector stores unmasked.
    B, S, D = 2, 8, 128

    key = jax.random.PRNGKey(0)
    k_x1, k_x2, k_we, k_ww = jax.random.split(key, 4)

    x1 = jax.random.normal(k_x1, (B, S, D), jnp.float32)
    x2 = jax.random.normal(k_x2, (B, S, D), jnp.float32)

    # evidence: nn.Linear(2D -> D), xavier_uniform weight, zero bias,
    # stored here as (in, out) = (2D, D) so the kernel computes x @ W.
    we = _xavier_uniform(k_we, fan_in=2 * D, fan_out=D, shape=(2 * D, D))
    be = jnp.zeros((D,), jnp.float32)
    # weight: nn.Linear(D -> D), xavier_uniform weight, zero bias.
    ww = _xavier_uniform(k_ww, fan_in=D, fan_out=D, shape=(D, D))
    bw = jnp.zeros((D,), jnp.float32)
    # Dropout(p=0.0) is identity -> omitted.

    ref = _reference(x1, x2, we, be, ww, bw)

    # 1) f32 I/O with f32 MXU operands (tolerance covers possible multi-pass
    #    MXU rounding of f32 operands).
    out_f32 = jax.block_until_ready(
        attention_template(x1, x2, we, be, ww, bw, matmul_dtype=jnp.float32))
    assert out_f32.shape == (B, S, D)
    assert jnp.allclose(out_f32, ref, atol=2e-2, rtol=2e-2), "f32 kernel mismatch"

    # 2) Default path: f32 I/O, bf16 MXU operands, f32 accumulation/gating.
    out_def = jax.block_until_ready(attention_template(x1, x2, we, be, ww, bw))
    assert out_def.shape == (B, S, D)
    assert jnp.allclose(out_def, ref, atol=8e-2, rtol=8e-2), "bf16-matmul mismatch"

    # 3) Reduced-precision I/O path: bf16 in HBM (halves streamed bytes),
    #    bf16 MXU operands, f32 gating; compare against the reference on the
    #    same bf16-quantized inputs.
    x1b = x1.astype(jnp.bfloat16)
    x2b = x2.astype(jnp.bfloat16)
    ref_b = _reference(x1b.astype(jnp.float32), x2b.astype(jnp.float32),
                       we, be, ww, bw)
    out_b = jax.block_until_ready(attention_template(x1b, x2b, we, be, ww, bw))
    assert out_b.dtype == jnp.bfloat16 and out_b.shape == (B, S, D)
    assert jnp.allclose(out_b.astype(jnp.float32), ref_b, atol=8e-2, rtol=8e-2), \
        "bf16-I/O kernel mismatch"

    print("KERNEL_OK")
</pallas_src>

<mosaic_0001>
module attributes {stable_mosaic.version = 11 : i64} {
  func.func @_attention_kernel(%arg0: i32, %arg1: memref<8x128xf32, #tpu.memory_space<vmem>>, %arg2: memref<8x128xf32, #tpu.memory_space<vmem>>, %arg3: memref<256x128xf32, #tpu.memory_space<vmem>>, %arg4: memref<1x128xf32, #tpu.memory_space<vmem>>, %arg5: memref<128x128xf32, #tpu.memory_space<vmem>>, %arg6: memref<1x128xf32, #tpu.memory_space<vmem>>, %arg7: memref<8x128xf32, #tpu.memory_space<vmem>>) attributes {dimension_semantics = [#tpu.dimension_semantics<parallel>], iteration_bounds = array<i64: 2>, scalar_prefetch = 0 : i64, scratch_operands = 0 : i64, tpu.core_type = #tpu.core_type<tc>, window_params = [{transform_indices = @transform_0, window_bounds = array<i64: 8, 128>}, {transform_indices = @transform_1, window_bounds = array<i64: 8, 128>}, {pipeline_mode = #tpu.pipeline_mode<synchronous>, transform_indices = @transform_2, window_bounds = array<i64: 256, 128>}, {pipeline_mode = #tpu.pipeline_mode<synchronous>, transform_indices = @transform_3, window_bounds = array<i64: 1, 128>}, {pipeline_mode = #tpu.pipeline_mode<synchronous>, transform_indices = @transform_4, window_bounds = array<i64: 128, 128>}, {pipeline_mode = #tpu.pipeline_mode<synchronous>, transform_indices = @transform_5, window_bounds = array<i64: 1, 128>}, {transform_indices = @transform_6, window_bounds = array<i64: 8, 128>}]} {
    %c0 = arith.constant 0 : index
    %c0_0 = arith.constant 0 : index
    %0 = vector.load %arg1[%c0, %c0_0] : memref<8x128xf32, #tpu.memory_space<vmem>>, vector<8x128xf32>
    %c0_1 = arith.constant 0 : index
    %c0_2 = arith.constant 0 : index
    %1 = vector.load %arg2[%c0_1, %c0_2] : memref<8x128xf32, #tpu.memory_space<vmem>>, vector<8x128xf32>
    %2 = tpu.concatenate %0, %1 in 1 : vector<8x128xf32>, vector<8x128xf32> -> vector<8x256xf32>
    %c0_3 = arith.constant 0 : index
    %c0_4 = arith.constant 0 : index
    %3 = vector.load %arg3[%c0_3, %c0_4] : memref<256x128xf32, #tpu.memory_space<vmem>>, vector<256x128xf32>
    %cst = arith.constant dense<0.000000e+00> : vector<8x128xf32>
    %4 = tpu.matmul %2, %3, %cst {dimension_numbers = #tpu.dot_dimension_numbers<[1], [0], [0], [1], [0, 0, 1, 1], [], []>} : vector<8x256xf32>, vector<256x128xf32>, vector<8x128xf32> -> vector<8x128xf32>
    %c0_5 = arith.constant 0 : index
    %c0_6 = arith.constant 0 : index
    %5 = vector.load %arg4[%c0_5, %c0_6] : memref<1x128xf32, #tpu.memory_space<vmem>>, vector<1x128xf32>
    %6 = vector.broadcast %5 : vector<1x128xf32> to vector<8x128xf32>
    %7 = arith.addf %4, %6 : vector<8x128xf32>
    %8 = math.tanh %7 : vector<8x128xf32>
    %c0_7 = arith.constant 0 : index
    %c0_8 = arith.constant 0 : index
    %9 = vector.load %arg5[%c0_7, %c0_8] : memref<128x128xf32, #tpu.memory_space<vmem>>, vector<128x128xf32>
    %cst_9 = arith.constant dense<0.000000e+00> : vector<8x128xf32>
    %10 = tpu.matmul %8, %9, %cst_9 {dimension_numbers = #tpu.dot_dimension_numbers<[1], [0], [0], [1], [0, 0, 1, 1], [], []>} : vector<8x128xf32>, vector<128x128xf32>, vector<8x128xf32> -> vector<8x128xf32>
    %c0_10 = arith.constant 0 : index
    %c0_11 = arith.constant 0 : index
    %11 = vector.load %arg6[%c0_10, %c0_11] : memref<1x128xf32, #tpu.memory_space<vmem>>, vector<1x128xf32>
    %12 = vector.broadcast %11 : vector<1x128xf32> to vector<8x128xf32>
    %13 = arith.addf %10, %12 : vector<8x128xf32>
    %14 = arith.negf %13 : vector<8x128xf32>
    %15 = math.exp %14 : vector<8x128xf32>
    %cst_12 = arith.constant 1.000000e+00 : f32
    %16 = vector.broadcast %cst_12 : f32 to vector<8x128xf32>
    %17 = arith.addf %16, %15 : vector<8x128xf32>
    %18 = arith.divf %16, %17 : vector<8x128xf32>
    %c0_13 = arith.constant 0 : index
    %c0_14 = arith.constant 0 : index
    %19 = vector.load %arg1[%c0_13, %c0_14] : memref<8x128xf32, #tpu.memory_space<vmem>>, vector<8x128xf32>
    %c0_15 = arith.constant 0 : index
    %c0_16 = arith.constant 0 : index
    %20 = vector.load %arg2[%c0_15, %c0_16] : memref<8x128xf32, #tpu.memory_space<vmem>>, vector<8x128xf32>
    %21 = arith.subf %19, %20 : vector<8x128xf32>
    %22 = arith.mulf %18, %21 : vector<8x128xf32>
    %23 = arith.addf %20, %22 : vector<8x128xf32>
    %c0_17 = arith.constant 0 : index
    %c0_18 = arith.constant 0 : index
    %24 = vector.load %arg7[%c0_17, %c0_18] : memref<8x128xf32, #tpu.memory_space<vmem>>, vector<8x128xf32>
    tpu.vector_store %arg7[%c0_17, %c0_18], %23 {strides = array<i32>} : memref<8x128xf32, #tpu.memory_space<vmem>>, vector<8x128xf32>,
    return
  }
  func.func @transform_0(%arg0: i32) -> (i32, i32) {
    %c0_i32 = arith.constant 0 : i32
    %c0_i32_0 = arith.constant 0 : i32
    return %arg0, %c0_i32 : i32, i32
  }
  func.func @transform_1(%arg0: i32) -> (i32, i32) {
    %c0_i32 = arith.constant 0 : i32
    %c0_i32_0 = arith.constant 0 : i32
    return %arg0, %c0_i32 : i32, i32
  }
  func.func @transform_2(%arg0: i32) -> (i32, i32) {
    %c0_i32 = arith.constant 0 : i32
    %c0_i32_0 = arith.constant 0 : i32
    %c0_i32_1 = arith.constant 0 : i32
    return %c0_i32, %c0_i32_0 : i32, i32
  }
  func.func @transform_3(%arg0: i32) -> (i32, i32) {
    %c0_i32 = arith.constant 0 : i32
    %c0_i32_0 = arith.constant 0 : i32
    %c0_i32_1 = arith.constant 0 : i32
    return %c0_i32, %c0_i32_0 : i32, i32
  }
  func.func @transform_4(%arg0: i32) -> (i32, i32) {
    %c0_i32 = arith.constant 0 : i32
    %c0_i32_0 = arith.constant 0 : i32
    %c0_i32_1 = arith.constant 0 : i32
    return %c0_i32, %c0_i32_0 : i32, i32
  }
  func.func @transform_5(%arg0: i32) -> (i32, i32) {
    %c0_i32 = arith.constant 0 : i32
    %c0_i32_0 = arith.constant 0 : i32
    %c0_i32_1 = arith.constant 0 : i32
    return %c0_i32, %c0_i32_0 : i32, i32
  }
  func.func @transform_6(%arg0: i32) -> (i32, i32) {
    %c0_i32 = arith.constant 0 : i32
    %c0_i32_0 = arith.constant 0 : i32
    return %arg0, %c0_i32 : i32, i32
  }
}

</mosaic_0001>

<llo_original>
// kernel: tpu_custom_call.1
$region0: #{tpu_custom_call.1}
  #allocation0 [shape = 'u32[]', space=smem, size = 0x4, offset = 0x4, fixed_abs, tag = 'smem constant byte address 0x4 - core index']
  #allocation1 [shape = 'u32[144,128]{1,0:T(1,128)}', space=vmem, size = 0x12000, scoped, tag = 'internal scratch']
  %s0 = inlined_call_operand.hbm [shape: f32[16,128], index: 0, kind: input, shape index: {}]
  %s1 = inlined_call_operand.hbm [shape: f32[16,128], index: 1, kind: input, shape index: {}]
  %s2 = inlined_call_operand.hbm [shape: f32[256,128], index: 2, kind: input, shape index: {}]
  %s3 = inlined_call_operand.vmem [shape: f32[1,128], index: 3, kind: input, shape index: {}]
  %s4 = inlined_call_operand.hbm [shape: f32[128,128], index: 4, kind: input, shape index: {}]
  %s5 = inlined_call_operand.vmem [shape: f32[1,128], index: 5, kind: input, shape index: {}]
  %s6 = inlined_call_operand.hbm [shape: f32[16,128], index: 6, kind: output, shape index: {}]
  %s7 = sld [smem:[#allocation0]]
  $region73: #{tpu_custom_call.1} parent=0
    _
  %s9 = ssub.s32 1, %s7
  %s10 = scalar_select 0, %s9, %s7
  $region1: #{tpu_custom_call.1} parent=0
    #allocation2 [shape = 'u8[8192]{0}', space=vmem, size = 0x2000, scoped, tag = 'input window, operand 0']
    #allocation3 [shape = 's32[2]{0}', space=sflag, size = 0x8, scoped, tag = 'scoped memory for tpu_custom_call.1']
    #allocation4 [shape = 's32[2]{0}', space=sflag, size = 0x8, scoped, tag = 'scoped memory for tpu_custom_call.1']
    #allocation5 [shape = 'u8[8192]{0}', space=vmem, size = 0x2000, scoped, tag = 'input window, operand 1']
    #allocation6 [shape = 's32[2]{0}', space=sflag, size = 0x8, scoped, tag = 'scoped memory for tpu_custom_call.1']
    #allocation7 [shape = 'u8[131072]{0}', space=vmem, size = 0x20000, scoped, tag = 'input window, operand 2, single buffered']
    #allocation8 [shape = 'u8[65536]{0}', space=vmem, size = 0x10000, scoped, tag = 'input window, operand 4, single buffered']
    #allocation9 [shape = 's32[1]{0}', space=sflag, size = 0x4, scoped, tag = 'scoped memory for tpu_custom_call.1']
    #allocation10 [shape = 'u8[8192]{0}', space=vmem, size = 0x2000, scoped, tag = 'output window, operand 0']
    %11 = vsyncpa [#allocation3], 0
    %s12 = scalar_lea.sflag [#allocation3], 1
    %13 = vsyncpa %s12, 0
    %14 = vsyncpa [#allocation6], 0
    %s15 = scalar_lea.sflag [#allocation6], 1
    %16 = vsyncpa %s15, 0
    %17 = vsyncpa [#allocation9], 0
    %18 = vsyncpa [#allocation4], 0
    %s19 = scalar_lea.sflag [#allocation4], 1
    %20 = vsyncpa %s19, 0
    loop: start=0, step=1, limit=4
    $region2: #{tpu_custom_call.1} parent=1 // loop_pre_header
      _
    $region3: #{tpu_custom_call.1} parent=1 // loop_header
      %s22 = sphi 0, %s26
      %p23 = scmp.ge.s32.totalorder %s22, 4
      %s32 = sphi 0, %s34
      %s35 = sphi 0, %s32
      %s36 = sphi 0, %s35
      %s52 = sphi 0, %s36
      %s58 = sphi 0, %s60
      %s61 = sphi 0, %s58
      %s62 = sphi 0, %s61
      %s78 = sphi 0, %s62
      %s82 = sphi 0, %s82
      %s84 = sphi 0, %s82
      %s85 = sphi 0, %s84
      %s99 = sphi 0, %s85
      %s103 = sphi 0, %s103
      %s105 = sphi 0, %s103
      %s106 = sphi 0, %s105
      %s120 = sphi 0, %s106
      %s124 = sphi 0, %s124
      %s126 = sphi 0, %s124
      %s127 = sphi 0, %s126
      %s141 = sphi 0, %s127
      %s145 = sphi 0, %s145
      %s147 = sphi 0, %s145
      %s148 = sphi 0, %s147
      %s162 = sphi 0, %s148
      %s168 = sphi 0, %s170
      %s171 = sphi 0, %s168
      %s172 = sphi 0, %s171
      %s188 = sphi 0, %s172
    $region4: #{tpu_custom_call.1} parent=1 // loop_header_branch
      %25 = sbr.rel (%p23) target = $region8
    $region5: #{tpu_custom_call.1} parent=1 // loop_body
      %s27 = ssub.s32 %s22, 1
      %s28 = ssub.s32 %s22, 2
      %s29 = sadd.s32 %s22, 1
      %s30 = ssub.s32 %s22, %s29
      %p31 = scmp.eq.s32.totalorder %s30, 0
      %s33 = sadd.s32 %s32, 1
      %s34 = scalar_select %p31, %s32, %s33
      %p37 = pneg %p31
      %p38 = scmp.eq.s32.totalorder %s22, 1
      %p39 = por %p37, %p38
      %p40 = scmp.ne.s32.totalorder %s32, %s35
      %p41 = scmp.eq.s32.totalorder %s22, 0
      %p42 = por %p40, %p41
      %p43 = scmp.ne.s32.totalorder %s32, %s35
      %p44 = scmp.eq.s32.totalorder %s27, 1
      %p45 = por %p43, %p44
      %p46 = scmp.ne.s32.totalorder %s35, %s36
      %p47 = scmp.eq.s32.totalorder %s27, 0
      %p48 = por %p46, %p47
      %p49 = scmp.ne.s32.totalorder %s35, %s36
      %p50 = scmp.eq.s32.totalorder %s28, 1
      %p51 = por %p49, %p50
      %p53 = scmp.ne.s32.totalorder %s36, %s52
      %p54 = scmp.eq.s32.totalorder %s28, 0
      %p55 = por %p53, %p54
      %s56 = ssub.s32 %s22, %s29
      %p57 = scmp.eq.s32.totalorder %s56, 0
      %s59 = sadd.s32 %s58, 1
      %s60 = scalar_select %p57, %s58, %s59
      %p63 = pneg %p57
      %p64 = scmp.eq.s32.totalorder %s22, 1
      %p65 = por %p63, %p64
      %p66 = scmp.ne.s32.totalorder %s58, %s61
      %p67 = scmp.eq.s32.totalorder %s22, 0
      %p68 = por %p66, %p67
      %p69 = scmp.ne.s32.totalorder %s58, %s61
      %p70 = scmp.eq.s32.totalorder %s27, 1
      %p71 = por %p69, %p70
      %p72 = scmp.ne.s32.totalorder %s61, %s62
      %p73 = scmp.eq.s32.totalorder %s27, 0
      %p74 = por %p72, %p73
      %p75 = scmp.ne.s32.totalorder %s61, %s62
      %p76 = scmp.eq.s32.totalorder %s28, 1
      %p77 = por %p75, %p76
      %p79 = scmp.ne.s32.totalorder %s62, %s78
      %p80 = scmp.eq.s32.totalorder %s28, 0
      %p81 = por %p79, %p80
      %s83 = sadd.s32 %s82, 1
      %p86 = scmp.eq.s32.totalorder %s22, 1
      %p87 = scmp.ne.s32.totalorder %s82, %s84
      %p88 = scmp.eq.s32.totalorder %s22, 0
      %p89 = por %p87, %p88
      %p90 = scmp.ne.s32.totalorder %s82, %s84
      %p91 = scmp.eq.s32.totalorder %s27, 1
      %p92 = por %p90, %p91
      %p93 = scmp.ne.s32.totalorder %s84, %s85
      %p94 = scmp.eq.s32.totalorder %s27, 0
      %p95 = por %p93, %p94
      %p96 = scmp.ne.s32.totalorder %s84, %s85
      %p97 = scmp.eq.s32.totalorder %s28, 1
      %p98 = por %p96, %p97
      %p100 = scmp.ne.s32.totalorder %s85, %s99
      %p101 = scmp.eq.s32.totalorder %s28, 0
      %p102 = por %p100, %p101
      %s104 = sadd.s32 %s103, 1
      %p107 = scmp.eq.s32.totalorder %s22, 1
      %p108 = scmp.ne.s32.totalorder %s103, %s105
      %p109 = scmp.eq.s32.totalorder %s22, 0
      %p110 = por %p108, %p109
      %p111 = scmp.ne.s32.totalorder %s103, %s105
      %p112 = scmp.eq.s32.totalorder %s27, 1
      %p113 = por %p111, %p112
      %p114 = scmp.ne.s32.totalorder %s105, %s106
      %p115 = scmp.eq.s32.totalorder %s27, 0
      %p116 = por %p114, %p115
      %p117 = scmp.ne.s32.totalorder %s105, %s106
      %p118 = scmp.eq.s32.totalorder %s28, 1
      %p119 = por %p117, %p118
      %p121 = scmp.ne.s32.totalorder %s106, %s120
      %p122 = scmp.eq.s32.totalorder %s28, 0
      %p123 = por %p121, %p122
      %s125 = sadd.s32 %s124, 1
      %p128 = scmp.eq.s32.totalorder %s22, 1
      %p129 = scmp.ne.s32.totalorder %s124, %s126
      %p130 = scmp.eq.s32.totalorder %s22, 0
      %p131 = por %p129, %p130
      %p132 = scmp.ne.s32.totalorder %s124, %s126
      %p133 = scmp.eq.s32.totalorder %s27, 1
      %p134 = por %p132, %p133
      %p135 = scmp.ne.s32.totalorder %s126, %s127
      %p136 = scmp.eq.s32.totalorder %s27, 0
      %p137 = por %p135, %p136
      %p138 = scmp.ne.s32.totalorder %s126, %s127
      %p139 = scmp.eq.s32.totalorder %s28, 1
      %p140 = por %p138, %p139
      %p142 = scmp.ne.s32.totalorder %s127, %s141
      %p143 = scmp.eq.s32.totalorder %s28, 0
      %p144 = por %p142, %p143
      %s146 = sadd.s32 %s145, 1
      %p149 = scmp.eq.s32.totalorder %s22, 1
      %p150 = scmp.ne.s32.totalorder %s145, %s147
      %p151 = scmp.eq.s32.totalorder %s22, 0
      %p152 = por %p150, %p151
      %p153 = scmp.ne.s32.totalorder %s145, %s147
      %p154 = scmp.eq.s32.totalorder %s27, 1
      %p155 = por %p153, %p154
      %p156 = scmp.ne.s32.totalorder %s147, %s148
      %p157 = scmp.eq.s32.totalorder %s27, 0
      %p158 = por %p156, %p157
      %p159 = scmp.ne.s32.totalorder %s147, %s148
      %p160 = scmp.eq.s32.totalorder %s28, 1
      %p161 = por %p159, %p160
      %p163 = scmp.ne.s32.totalorder %s148, %s162
      %p164 = scmp.eq.s32.totalorder %s28, 0
      %p165 = por %p163, %p164
      %s166 = ssub.s32 %s22, %s29
      %p167 = scmp.eq.s32.totalorder %s166, 0
      %s169 = sadd.s32 %s168, 1
      %s170 = scalar_select %p167, %s168, %s169
      %p173 = pneg %p167
      %p174 = scmp.eq.s32.totalorder %s22, 1
      %p175 = por %p173, %p174
      %p176 = scmp.ne.s32.totalorder %s168, %s171
      %p177 = scmp.eq.s32.totalorder %s22, 0
      %p178 = por %p176, %p177
      %p179 = scmp.ne.s32.totalorder %s168, %s171
      %p180 = scmp.eq.s32.totalorder %s27, 1
      %p181 = por %p179, %p180
      %p182 = scmp.ne.s32.totalorder %s171, %s172
      %p183 = scmp.eq.s32.totalorder %s27, 0
      %p184 = por %p182, %p183
      %p185 = scmp.ne.s32.totalorder %s171, %s172
      %p186 = scmp.eq.s32.totalorder %s28, 1
      %p187 = por %p185, %p186
      %p189 = scmp.ne.s32.totalorder %s172, %s188
      %p190 = scmp.eq.s32.totalorder %s28, 0
      %p191 = por %p189, %p190
      %p192 = scmp.le.s32.totalorder 1, %s22
      %p193 = scmp.lt.s32.totalorder %s22, 3
      %p194 = pnand %p192, %p193
      %p195 = pneg %p194
      // Predicated region
      $region9: #{tpu_custom_call.1} parent=5 // pred_check
        _
      $region10: #{tpu_custom_call.1} parent=5 // pred_check_branch
        %197 = sbr.rel (%p194) target = $region12
      $region11: #{tpu_custom_call.1} parent=5 // pred_region
        %s198 = ssub.s32 %s22, 1
        // Predicated region
        $region13: #{tpu_custom_call.1} parent=11 // pred_check
          %p199 = pneg %p95
        $region14: #{tpu_custom_call.1} parent=11 // pred_check_branch
          %201 = sbr.rel (%p199) target = $region16
        $region15: #{tpu_custom_call.1} parent=11 // pred_region
          %s203 = ssub.s32 4096, 4096
          %204 = vsyncadd [#allocation6], %s203
          %s205 = sshll.u32 [#allocation7], 4
          %s206 = int_to_ptr.vmem [resolvable:$true] %s205
          %211 = dma.hbm_to_vmem [thread:$0]  %s2, 4096, %s206, [#allocation6], 128, 128, 8
        $region16: #{tpu_custom_call.1} parent=11 // pred_fallthru
          _
        // Predicated region
        $region17: #{tpu_custom_call.1} parent=11 // pred_check
          %p212 = pneg %p116
        $region18: #{tpu_custom_call.1} parent=11 // pred_check_branch
          %214 = sbr.rel (%p212) target = $region20
        $region19: #{tpu_custom_call.1} parent=11 // pred_region
          _
        $region20: #{tpu_custom_call.1} parent=11 // pred_fallthru
          _
        // Predicated region
        $region21: #{tpu_custom_call.1} parent=11 // pred_check
          %p215 = pneg %p137
        $region22: #{tpu_custom_call.1} parent=11 // pred_check_branch
          %217 = sbr.rel (%p215) target = $region24
        $region23: #{tpu_custom_call.1} parent=11 // pred_region
          %s219 = ssub.s32 2048, 2048
          %220 = vsyncadd [#allocation9], %s219
          %s221 = sshll.u32 [#allocation8], 4
          %s222 = int_to_ptr.vmem [resolvable:$true] %s221
          %227 = dma.hbm_to_vmem [thread:$0]  %s4, 2048, %s222, [#allocation9], 128, 128, 8
        $region24: #{tpu_custom_call.1} parent=11 // pred_fallthru
          _
        // Predicated region
        $region25: #{tpu_custom_call.1} parent=11 // pred_check
          %p228 = pneg %p158
        $region26: #{tpu_custom_call.1} parent=11 // pred_check_branch
          %230 = sbr.rel (%p228) target = $region28
        $region27: #{tpu_custom_call.1} parent=11 // pred_region
          _
        $region28: #{tpu_custom_call.1} parent=11 // pred_fallthru
          _
      $region12: #{tpu_custom_call.1} parent=5 // pred_fallthru
        _
      %p231 = scmp.lt.s32.totalorder %s22, 2
      // Predicated region
      $region29: #{tpu_custom_call.1} parent=5 // pred_check
        %p232 = pneg %p231
      $region30: #{tpu_custom_call.1} parent=5 // pred_check_branch
        %234 = sbr.rel (%p232) target = $region32
      $region31: #{tpu_custom_call.1} parent=5 // pred_region
        // Predicated region
        $region33: #{tpu_custom_call.1} parent=31 // pred_check
          %p235 = pneg %p42
        $region34: #{tpu_custom_call.1} parent=31 // pred_check_branch
          %237 = sbr.rel (%p235) target = $region36
        $region35: #{tpu_custom_call.1} parent=31 // pred_region
          %s238 = sand.u32 %s32, 1
          %s239 = scalar_lea.sflag [#allocation3], %s238
          %s240 = sand.u32 %s32, 1
          %s241 = smul.addr %s240, 8
          %s242 = scalar_lea.vmem [#allocation2], %s241
          %s244 = ssub.s32 128, 128
          %245 = vsyncadd %s239, %s244
          %s246 = smul.addr %s22, 128
          %s247 = scalar_lea.hbm %s0, %s246
          %s249 = sshll.u32 %s242, 4
          %s250 = int_to_ptr.vmem [resolvable:$true] %s249
          %252 = dma.hbm_to_vmem [thread:$0]  %s247, 128, %s250, %s239
        $region36: #{tpu_custom_call.1} parent=31 // pred_fallthru
          _
        // Predicated region
        $region37: #{tpu_custom_call.1} parent=31 // pred_check
          %p253 = pneg %p68
        $region38: #{tpu_custom_call.1} parent=31 // pred_check_branch
          %255 = sbr.rel (%p253) target = $region40
        $region39: #{tpu_custom_call.1} parent=31 // pred_region
          %s256 = sand.u32 %s22, 1
          %s257 = scalar_lea.sflag [#allocation6], %s256
          %s258 = sand.u32 %s58, 1
          %s259 = smul.addr %s258, 8
          %s260 = scalar_lea.vmem [#allocation5], %s259
          %s262 = ssub.s32 128, 128
          %263 = vsyncadd %s257, %s262
          %s264 = smul.addr %s22, 128
          %s265 = scalar_lea.hbm %s1, %s264
          %s267 = sshll.u32 %s260, 4
          %s268 = int_to_ptr.vmem [resolvable:$true] %s267
          %270 = dma.hbm_to_vmem [thread:$0]  %s265, 128, %s268, %s257
        $region40: #{tpu_custom_call.1} parent=31 // pred_fallthru
          _
      $region32: #{tpu_custom_call.1} parent=5 // pred_fallthru
        _
      %p271 = scmp.le.s32.totalorder 1, %s22
      %p272 = scmp.lt.s32.totalorder %s22, 3
      %p273 = pnand %p271, %p272
      %p274 = pneg %p273
      // Predicated region
      $region41: #{tpu_custom_call.1} parent=5 // pred_check
        _
      $region42: #{tpu_custom_call.1} parent=5 // pred_check_branch
        %276 = sbr.rel (%p273) target = $region44
      $region43: #{tpu_custom_call.1} parent=5 // pred_region
        %s277 = ssub.s32 %s22, 1
        %s278 = sand.u32 %s35, 1
        %s279 = scalar_lea.sflag [#allocation3], %s278
        %s280 = sand.u32 %s35, 1
        %s281 = smul.addr %s280, 8
        %s282 = scalar_lea.vmem [#allocation2], %s281
        // Predicated region
        $region45: #{tpu_custom_call.1} parent=43 // pred_check
          %p283 = pneg %p48
        $region46: #{tpu_custom_call.1} parent=43 // pred_check_branch
          %285 = sbr.rel (%p283) target = $region48
        $region47: #{tpu_custom_call.1} parent=43 // pred_region
          %286 = dma.done %s279, 128
        $region48: #{tpu_custom_call.1} parent=43 // pred_fallthru
          _
        %s287 = sand.u32 %s27, 1
        %s288 = scalar_lea.sflag [#allocation6], %s287
        %s289 = sand.u32 %s61, 1
        %s290 = smul.addr %s289, 8
        %s291 = scalar_lea.vmem [#allocation5], %s290
        // Predicated region
        $region49: #{tpu_custom_call.1} parent=43 // pred_check
          %p292 = pneg %p74
        $region50: #{tpu_custom_call.1} parent=43 // pred_check_branch
          %294 = sbr.rel (%p292) target = $region52
        $region51: #{tpu_custom_call.1} parent=43 // pred_region
          %295 = dma.done %s288, 128
        $region52: #{tpu_custom_call.1} parent=43 // pred_fallthru
          _
        // Predicated region
        $region53: #{tpu_custom_call.1} parent=43 // pred_check
          %p296 = pneg %p95
        $region54: #{tpu_custom_call.1} parent=43 // pred_check_branch
          %298 = sbr.rel (%p296) target = $region56
        $region55: #{tpu_custom_call.1} parent=43 // pred_region
          %299 = dma.done [#allocation6], 4096
        $region56: #{tpu_custom_call.1} parent=43 // pred_fallthru
          _
        // Predicated region
        $region57: #{tpu_custom_call.1} parent=43 // pred_check
          %p300 = pneg %p137
        $region58: #{tpu_custom_call.1} parent=43 // pred_check_branch
          %302 = sbr.rel (%p300) target = $region60
        $region59: #{tpu_custom_call.1} parent=43 // pred_region
          %303 = dma.done [#allocation9], 2048
        $region60: #{tpu_custom_call.1} parent=43 // pred_fallthru
          _
        %s304 = sand.u32 %s35, 1
        %s305 = scalar_lea.sflag [#allocation3], %s304
        %s306 = sand.u32 %s35, 1
        %s307 = smul.addr %s306, 8
        %s308 = scalar_lea.vmem [#allocation2], %s307
        %p309 = pneg %p48
        %p310 = pneg %p45
        %s311 = sand.u32 %s27, 1
        %s312 = scalar_lea.sflag [#allocation6], %s311
        %s313 = sand.u32 %s61, 1
        %s314 = smul.addr %s313, 8
        %s315 = scalar_lea.vmem [#allocation5], %s314
        %p316 = pneg %p74
        %p317 = pneg %p71
        %p318 = pneg %p95
        %p319 = pneg %p92
        %p320 = pneg %p116
        %p321 = pneg %p113
        %p322 = pneg %p137
        %p323 = pneg %p134
        %p324 = pneg %p158
        %p325 = pneg %p155
        %p326 = pneg %p184
        %p327 = pneg %p181
        %s328 = sand.u32 %s171, 1
        %s329 = scalar_lea.sflag [#allocation4], %s328
        %s330 = sand.u32 %s171, 1
        %s331 = smul.addr %s330, 8
        %s332 = scalar_lea.vmem [#allocation10], %s331
        %v333 = vld [vmem:[%s282] sm:$0xff]
        %v334 = vld [vmem:[%s291] sm:$0xff]
        %v335 = vld [vmem:[#allocation7] sm:$0xff]
        %v336 = vld [vmem:[#allocation7 + $0x8] sm:$0xff]
        %v337 = vld [vmem:[#allocation7 + $0x10] sm:$0xff]
        %v338 = vld [vmem:[#allocation7 + $0x18] sm:$0xff]
        %v339 = vld [vmem:[#allocation7 + $0x20] sm:$0xff]
        %v340 = vld [vmem:[#allocation7 + $0x28] sm:$0xff]
        %v341 = vld [vmem:[#allocation7 + $0x30] sm:$0xff]
        %v342 = vld [vmem:[#allocation7 + $0x38] sm:$0xff]
        %v343 = vld [vmem:[#allocation7 + $0x40] sm:$0xff]
        %v344 = vld [vmem:[#allocation7 + $0x48] sm:$0xff]
        %v345 = vld [vmem:[#allocation7 + $0x50] sm:$0xff]
        %v346 = vld [vmem:[#allocation7 + $0x58] sm:$0xff]
        %v347 = vld [vmem:[#allocation7 + $0x60] sm:$0xff]
        %v348 = vld [vmem:[#allocation7 + $0x68] sm:$0xff]
        %v349 = vld [vmem:[#allocation7 + $0x70] sm:$0xff]
        %v350 = vld [vmem:[#allocation7 + $0x78] sm:$0xff]
        %v351 = vld [vmem:[#allocation7 + $0x80] sm:$0xff]
        %v352 = vld [vmem:[#allocation7 + $0x88] sm:$0xff]
        %v353 = vld [vmem:[#allocation7 + $0x90] sm:$0xff]
        %v354 = vld [vmem:[#allocation7 + $0x98] sm:$0xff]
        %v355 = vld [vmem:[#allocation7 + $0xa0] sm:$0xff]
        %v356 = vld [vmem:[#allocation7 + $0xa8] sm:$0xff]
        %v357 = vld [vmem:[#allocation7 + $0xb0] sm:$0xff]
        %v358 = vld [vmem:[#allocation7 + $0xb8] sm:$0xff]
        %v359 = vld [vmem:[#allocation7 + $0xc0] sm:$0xff]
        %v360 = vld [vmem:[#allocation7 + $0xc8] sm:$0xff]
        %v361 = vld [vmem:[#allocation7 + $0xd0] sm:$0xff]
        %v362 = vld [vmem:[#allocation7 + $0xd8] sm:$0xff]
        %v363 = vld [vmem:[#allocation7 + $0xe0] sm:$0xff]
        %v364 = vld [vmem:[#allocation7 + $0xe8] sm:$0xff]
        %v365 = vld [vmem:[#allocation7 + $0xf0] sm:$0xff]
        %v366 = vld [vmem:[#allocation7 + $0xf8] sm:$0xff]
        %v367 = vld [vmem:[%s3] sm:$0x1]
        %v369 = vlaneseq
        %v370 = vshrl.u32 %v369, 7
        %v371 = vsub.s32 0, %v370
        %v372 = vrot.slane %v367, %v371
        %374 = vmatprep.subr.mxu0 0.0
        %375 = vmatpush1.msra.mxu0 %v335
        %376 = vmatprep.subr.mxu0 0.0
        %377 = vmatpush1.msra.mxu0 %v336
        %378 = vmatprep.subr.mxu0 0.0
        %379 = vmatpush1.msra.mxu0 %v337
        %380 = vmatprep.subr.mxu0 0.0
        %381 = vmatpush1.msra.mxu0 %v338
        %382 = vmatprep.subr.mxu0 0.0
        %383 = vmatpush1.msra.mxu0 %v339
        %384 = vmatprep.subr.mxu0 0.0
        %385 = vmatpush1.msra.mxu0 %v340
        %386 = vmatprep.subr.mxu0 0.0
        %387 = vmatpush1.msra.mxu0 %v341
        %388 = vmatprep.subr.mxu0 0.0
        %389 = vmatpush1.msra.mxu0 %v342
        %390 = vmatprep.subr.mxu0 0.0
        %391 = vmatpush1.msra.mxu0 %v343
        %392 = vmatprep.subr.mxu0 0.0
        %393 = vmatpush1.msra.mxu0 %v344
        %394 = vmatprep.subr.mxu0 0.0
        %395 = vmatpush1.msra.mxu0 %v345
        %396 = vmatprep.subr.mxu0 0.0
        %397 = vmatpush1.msra.mxu0 %v346
        %398 = vmatprep.subr.mxu0 0.0
        %399 = vmatpush1.msra.mxu0 %v347
        %400 = vmatprep.subr.mxu0 0.0
        %401 = vmatpush1.msra.mxu0 %v348
        %402 = vmatprep.subr.mxu0 0.0
        %403 = vmatpush1.msra.mxu0 %v349
        %404 = vmatprep.subr.mxu0 0.0
        %405 = vmatpush1.msra.mxu0 %v350
        %406 = vmatprep.subr.mxu0 0.0
        %407 = vmatpush1.msra.mxu0 %v351
        %408 = vmatprep.subr.mxu0 0.0
        %409 = vmatpush1.msra.mxu0 %v352
        %410 = vmatprep.subr.mxu0 0.0
        %411 = vmatpush1.msra.mxu0 %v353
        %412 = vmatprep.subr.mxu0 0.0
        %413 = vmatpush1.msra.mxu0 %v354
        %414 = vmatprep.subr.mxu0 0.0
        %415 = vmatpush1.msra.mxu0 %v355
        %416 = vmatprep.subr.mxu0 0.0
        %417 = vmatpush1.msra.mxu0 %v356
        %418 = vmatprep.subr.mxu0 0.0
        %419 = vmatpush1.msra.mxu0 %v357
        %420 = vmatprep.subr.mxu0 0.0
        %421 = vmatpush1.msra.mxu0 %v358
        %422 = vmatprep.subr.mxu0 0.0
        %423 = vmatpush1.msra.mxu0 %v359
        %424 = vmatprep.subr.mxu0 0.0
        %425 = vmatpush1.msra.mxu0 %v360
        %426 = vmatprep.subr.mxu0 0.0
        %427 = vmatpush1.msra.mxu0 %v361
        %428 = vmatprep.subr.mxu0 0.0
        %429 = vmatpush1.msra.mxu0 %v362
        %430 = vmatprep.subr.mxu0 0.0
        %431 = vmatpush1.msra.mxu0 %v363
        %432 = vmatprep.subr.mxu0 0.0
        %433 = vmatpush1.msra.mxu0 %v364
        %434 = vmatprep.subr.mxu0 0.0
        %435 = vmatpush1.msra.mxu0 %v365
        %436 = vmatprep.subr.mxu0 0.0
        %437 = vmatpush1.msra.mxu0 %v366
        %438 = vmatprep.mubr.f32.mxu0 %v334
        %439 = vmatmul.mubr.f32.gmra.mrb[0].mxu0 %v333
        %v440 = vpop.f32.mrb[0].mxu0
        %v441 = vadd.f32 %v372, %v440
        %v442 = vpop.f32.mrb[0].mxu0
        %443 = vdwg.mxu0
        %v444 = vtanh.pop %v441
        %v445 = vld [vmem:[#allocation8] sm:$0xff]
        %v446 = vld [vmem:[#allocation8 + $0x8] sm:$0xff]
        %v447 = vld [vmem:[#allocation8 + $0x10] sm:$0xff]
        %v448 = vld [vmem:[#allocation8 + $0x18] sm:$0xff]
        %v449 = vld [vmem:[#allocation8 + $0x20] sm:$0xff]
        %v450 = vld [vmem:[#allocation8 + $0x28] sm:$0xff]
        %v451 = vld [vmem:[#allocation8 + $0x30] sm:$0xff]
        %v452 = vld [vmem:[#allocation8 + $0x38] sm:$0xff]
        %v453 = vld [vmem:[#allocation8 + $0x40] sm:$0xff]
        %v454 = vld [vmem:[#allocation8 + $0x48] sm:$0xff]
        %v455 = vld [vmem:[#allocation8 + $0x50] sm:$0xff]
        %v456 = vld [vmem:[#allocation8 + $0x58] sm:$0xff]
        %v457 = vld [vmem:[#allocation8 + $0x60] sm:$0xff]
        %v458 = vld [vmem:[#allocation8 + $0x68] sm:$0xff]
        %v459 = vld [vmem:[#allocation8 + $0x70] sm:$0xff]
        %v460 = vld [vmem:[#allocation8 + $0x78] sm:$0xff]
        %v461 = vld [vmem:[%s5] sm:$0x1]
        %v463 = vlaneseq
        %v464 = vshrl.u32 %v463, 7
        %v465 = vsub.s32 0, %v464
        %v466 = vrot.slane %v461, %v465
        %468 = vmatprep.subr.mxu0 0.0
        %469 = vmatpush1.msra.mxu0 %v445
        %470 = vmatprep.subr.mxu0 0.0
        %471 = vmatpush1.msra.mxu0 %v446
        %472 = vmatprep.subr.mxu0 0.0
        %473 = vmatpush1.msra.mxu0 %v447
        %474 = vmatprep.subr.mxu0 0.0
        %475 = vmatpush1.msra.mxu0 %v448
        %476 = vmatprep.subr.mxu0 0.0
        %477 = vmatpush1.msra.mxu0 %v449
        %478 = vmatprep.subr.mxu0 0.0
        %479 = vmatpush1.msra.mxu0 %v450
        %480 = vmatprep.subr.mxu0 0.0
        %481 = vmatpush1.msra.mxu0 %v451
        %482 = vmatprep.subr.mxu0 0.0
        %483 = vmatpush1.msra.mxu0 %v452
        %484 = vmatprep.subr.mxu0 0.0
        %485 = vmatpush1.msra.mxu0 %v453
        %486 = vmatprep.subr.mxu0 0.0
        %487 = vmatpush1.msra.mxu0 %v454
        %488 = vmatprep.subr.mxu0 0.0
        %489 = vmatpush1.msra.mxu0 %v455
        %490 = vmatprep.subr.mxu0 0.0
        %491 = vmatpush1.msra.mxu0 %v456
        %492 = vmatprep.subr.mxu0 0.0
        %493 = vmatpush1.msra.mxu0 %v457
        %494 = vmatprep.subr.mxu0 0.0
        %495 = vmatpush1.msra.mxu0 %v458
        %496 = vmatprep.subr.mxu0 0.0
        %497 = vmatpush1.msra.mxu0 %v459
        %498 = vmatprep.subr.mxu0 0.0
        %499 = vmatpush1.msra.mxu0 %v460
        %500 = vmatprep.subr.mxu0 0.0
        %501 = vmatpush1.msra.mxu0 0.0
        %502 = vmatprep.subr.mxu0 0.0
        %503 = vmatpush1.msra.mxu0 0.0
        %504 = vmatprep.subr.mxu0 0.0
        %505 = vmatpush1.msra.mxu0 0.0
        %506 = vmatprep.subr.mxu0 0.0
        %507 = vmatpush1.msra.mxu0 0.0
        %508 = vmatprep.subr.mxu0 0.0
        %509 = vmatpush1.msra.mxu0 0.0
        %510 = vmatprep.subr.mxu0 0.0
        %511 = vmatpush1.msra.mxu0 0.0
        %512 = vmatprep.subr.mxu0 0.0
        %513 = vmatpush1.msra.mxu0 0.0
        %514 = vmatprep.subr.mxu0 0.0
        %515 = vmatpush1.msra.mxu0 0.0
        %516 = vmatprep.subr.mxu0 0.0
        %517 = vmatpush1.msra.mxu0 0.0
        %518 = vmatprep.subr.mxu0 0.0
        %519 = vmatpush1.msra.mxu0 0.0
        %520 = vmatprep.subr.mxu0 0.0
        %521 = vmatpush1.msra.mxu0 0.0
        %522 = vmatprep.subr.mxu0 0.0
        %523 = vmatpush1.msra.mxu0 0.0
        %524 = vmatprep.subr.mxu0 0.0
        %525 = vmatpush1.msra.mxu0 0.0
        %526 = vmatprep.subr.mxu0 0.0
        %527 = vmatpush1.msra.mxu0 0.0
        %528 = vmatprep.subr.mxu0 0.0
        %529 = vmatpush1.msra.mxu0 0.0
        %530 = vmatprep.subr.mxu0 0.0
        %531 = vmatpush1.msra.mxu0 0.0
        %532 = vmatprep.mubr.f32.mxu0 0.0
        %533 = vmatmul.mubr.f32.gmra.mrb[0].mxu0 %v444
        %v534 = vpop.f32.mrb[0].mxu0
        %v535 = vadd.f32 %v466, %v534
        %v536 = vpop.f32.mrb[0].mxu0
        %537 = vdwg.mxu0
        %v538 = vxor.u32 %v535, 2147483648
        %v539 = vmul.f32 %v538, 1.442695
        %v540 = vpow.pop %v539
        %v541 = vadd.f32 %v540, 1.0
        %v542 = vrcp.pop %v541
        %v543 = vmul.f32 1.0, %v542
        %v544 = vsub.f32 %v333, %v334
        %v545 = vmul.f32 %v543, %v544
        %v546 = vadd.f32 %v334, %v545
        %547 = vst [vmem:[%s332] sm:$0xff] %v546
        %s548 = sand.u32 %s171, 1
        %s549 = scalar_lea.sflag [#allocation4], %s548
        %s550 = sand.u32 %s171, 1
        %s551 = smul.addr %s550, 8
        %s552 = scalar_lea.vmem [#allocation10], %s551
        // Predicated region
        $region61: #{tpu_custom_call.1} parent=43 // pred_check
          %p553 = pneg %p181
        $region62: #{tpu_custom_call.1} parent=43 // pred_check_branch
          %555 = sbr.rel (%p553) target = $region64
        $region63: #{tpu_custom_call.1} parent=43 // pred_region
          %s557 = ssub.s32 128, 128
          %558 = vsyncadd %s549, %s557
          %s559 = smul.addr %s27, 128
          %s560 = scalar_lea.hbm %s6, %s559
          %s562 = sshll.u32 %s552, 4
          %s563 = int_to_ptr.vmem [resolvable:$true] %s562
          %565 = dma.vmem_to_hbm [thread:$0]  %s563, 128, %s560, %s549
        $region64: #{tpu_custom_call.1} parent=43 // pred_fallthru
          _
      $region44: #{tpu_custom_call.1} parent=5 // pred_fallthru
        _
      %p566 = scmp.le.s32.totalorder 2, %s22
      // Predicated region
      $region65: #{tpu_custom_call.1} parent=5 // pred_check
        %p567 = pneg %p566
      $region66: #{tpu_custom_call.1} parent=5 // pred_check_branch
        %569 = sbr.rel (%p567) target = $region68
      $region67: #{tpu_custom_call.1} parent=5 // pred_region
        %s570 = ssub.s32 %s22, 2
        // Predicated region
        $region69: #{tpu_custom_call.1} parent=67 // pred_check
          %p571 = pneg %p187
        $region70: #{tpu_custom_call.1} parent=67 // pred_check_branch
          %573 = sbr.rel (%p571) target = $region72
        $region71: #{tpu_custom_call.1} parent=67 // pred_region
          %s574 = sand.u32 %s172, 1
          %s575 = scalar_lea.sflag [#allocation4], %s574
          %s576 = sand.u32 %s172, 1
          %s577 = smul.addr %s576, 8
          %s578 = scalar_lea.vmem [#allocation10], %s577
          %579 = dma.done %s575, 128
        $region72: #{tpu_custom_call.1} parent=67 // pred_fallthru
          _
      $region68: #{tpu_custom_call.1} parent=5 // pred_fallthru
        _
    $region6: #{tpu_custom_call.1} parent=1 // loop_footer
      %s26 = sadd.s32 1, %s22
    $region7: #{tpu_custom_call.1} parent=1 // loop_footer_branch
      %21 = sbr.rel target = $region3
    $region8: #{tpu_custom_call.1} parent=1 // loop_exit
      _
    %580 = vsyncpa [#allocation3], 1
    %s581 = scalar_lea.sflag [#allocation3], 1
    %582 = vsyncpa %s581, 1
    %583 = vsyncpa [#allocation6], 1
    %s584 = scalar_lea.sflag [#allocation6], 1
    %585 = vsyncpa %s584, 1
    %586 = vsyncpa [#allocation9], 1
    %587 = vsyncpa [#allocation4], 1
    %s588 = scalar_lea.sflag [#allocation4], 1
    %589 = vsyncpa %s588, 1

</llo_original>
